<compile_context>
chip_gen: v7x
topology: tpu7x:2x2x1
jax: 0.10.0
libtpu: 0.0.40
codegen_flags: <defaults>
</compile_context>

<pallas_src>
import jax
import jax.numpy as jnp
from jax import lax
from jax.experimental import pallas as pl
from jax.experimental.pallas import tpu as pltpu


def _round_up(n: int, m: int) -> int:
    return ((n + m - 1) // m) * m


def _nonlinear_net_kernel(x_ref, w1t_ref, b1_ref, w2_ref, b2t_ref, ot_ref):
    # x:   [TB, D]   compute dtype (f32 or bf16)
    # w1t: [D,  Hp]  compute dtype          (Hp = round_up(D+1, 128))
    # b1:  [1,  Hp]  f32
    # w2:  [O,  Hp]  f32
    # b2t: [O,  1]   f32
    # ot:  [O,  TB]  f32  (lane-dense transposed logits)

    # fc1 (MXU) with f32 accumulation, bias + tanh in f32 (VPU/EUP).
    h = jnp.dot(x_ref[...], w1t_ref[...], preferred_element_type=jnp.float32)
    h = jnp.tanh(h + b1_ref[...])                      # [TB, Hp] f32

    # fc2 with transposed output: contract Hp of w2 against Hp of h -> [O, TB].
    # Keeps the store lane-dense (last dim = TB) instead of a masked O=2 store.
    out_t = lax.dot_general(
        w2_ref[...], h,
        dimension_numbers=(((1,), (1,)), ((), ())),
        preferred_element_type=jnp.float32)            # [O, TB]

    ot_ref[...] = (out_t + b2t_ref[...]).astype(ot_ref.dtype)


def prepare_nonlinear_net_params(w1, b1, w2, b2, compute_dtype=jnp.float32):
    """One-time weight prep (transpose + hidden-dim padding). Hoist out of the hot path."""
    H, D = w1.shape            # H = D + 1 (fc1 out), PyTorch layout [out, in]
    O = w2.shape[0]            # 2
    Hp = _round_up(H, 128)     # pad hidden dim to a clean lane multiple

    w1_f32 = jnp.asarray(w1, jnp.float32)
    w1t = jnp.zeros((D, Hp), compute_dtype).at[:, :H].set(
        w1_f32.T.astype(compute_dtype))                           # [D, Hp]
    b1p = jnp.zeros((1, Hp), jnp.float32).at[0, :H].set(
        jnp.asarray(b1, jnp.float32))                             # [1, Hp]
    w2p = jnp.zeros((O, Hp), jnp.float32).at[:, :H].set(
        jnp.asarray(w2, jnp.float32))                             # [O, Hp]
    b2t = jnp.asarray(b2, jnp.float32).reshape(O, 1)              # [O, 1]

    return dict(w1t=w1t, b1=b1p, w2=w2p, b2t=b2t,
                D=D, O=O, compute_dtype=compute_dtype)


def nonlinear_net_forward_prepared(x, params, *, block_b=1024):
    """Forward pass with pre-prepared params. Returns [B, O] f32 logits."""
    B, D = x.shape
    assert D == params["D"], "feature dim mismatch"
    O = params["O"]
    Hp = params["w1t"].shape[1]
    cd = params["compute_dtype"]

    # Batch tiling: one block for small B, else block_b-row tiles (pipelined,
    # VMEM-safe on v7x's 64 MiB: 2 bufs * TB * D * 4B + resident weights << 32 MiB).
    if B <= block_b:
        TB = max(_round_up(B, 8), 8)
        Bp = TB
    else:
        TB = block_b
        Bp = _round_up(B, TB)

    xp = jnp.asarray(x, jnp.float32).astype(cd)
    if Bp != B:
        xp = jnp.pad(xp, ((0, Bp - B), (0, 0)))

    grid = (Bp // TB,)
    out_t = pl.pallas_call(
        _nonlinear_net_kernel,
        out_shape=jax.ShapeDtypeStruct((O, Bp), jnp.float32),
        grid=grid,
        in_specs=[
            pl.BlockSpec((TB, D), lambda i: (i, 0)),   # x streams over batch
            pl.BlockSpec((D, Hp), lambda i: (0, 0)),   # weights stay resident
            pl.BlockSpec((1, Hp), lambda i: (0, 0)),
            pl.BlockSpec((O, Hp), lambda i: (0, 0)),
            pl.BlockSpec((O, 1), lambda i: (0, 0)),
        ],
        out_specs=pl.BlockSpec((O, TB), lambda i: (0, i)),   # lane-dense [O, TB]
        compiler_params=pltpu.CompilerParams(
            dimension_semantics=("parallel",)),
    )(xp, params["w1t"], params["b1"], params["w2"], params["b2t"])

    return out_t[:, :B].T   # [B, O]


def nonlinear_net_forward(x, w1, b1, w2, b2, *, compute_dtype=jnp.float32,
                          block_b=1024):
    """Convenience wrapper: prepare params then run (prefer the prepared API in loops)."""
    params = prepare_nonlinear_net_params(w1, b1, w2, b2, compute_dtype)
    return nonlinear_net_forward_prepared(x, params, block_b=block_b)


def nonlinear_net_predict(x, w1, b1, w2, b2, **kw):
    """Equivalent of NonLinearNet.predict: argmax over output logits (dim=1)."""
    logits = nonlinear_net_forward(x, w1, b1, w2, b2, **kw)
    return jnp.argmax(logits, axis=1)


if __name__ == "__main__":
    # Deterministic synthetic parameters (PyTorch-like uniform init bounds).
    key = jax.random.PRNGKey(0)
    k_x, k_w1, k_b1, k_w2, k_b2, k_xl = jax.random.split(key, 6)

    B = 8          # batch
    D = 32         # `dimensions`
    H = D + 1      # hidden = dimensions + 1
    O = 2          # output classes

    bound1 = 1.0 / jnp.sqrt(D)
    bound2 = 1.0 / jnp.sqrt(H)
    w1 = jax.random.uniform(k_w1, (H, D), jnp.float32, -bound1, bound1)
    b1 = jax.random.uniform(k_b1, (H,), jnp.float32, -bound1, bound1)
    w2 = jax.random.uniform(k_w2, (O, H), jnp.float32, -bound2, bound2)
    b2 = jax.random.uniform(k_b2, (O,), jnp.float32, -bound2, bound2)

    x = jax.random.normal(k_x, (B, D), jnp.float32)

    def ref_forward(xv):
        return jnp.tanh(xv @ w1.T + b1) @ w2.T + b2

    # --- small batch, f32 compute path ---
    params_f32 = prepare_nonlinear_net_params(w1, b1, w2, b2, jnp.float32)
    logits = jax.block_until_ready(nonlinear_net_forward_prepared(x, params_f32))
    assert logits.shape == (B, O)
    assert jnp.allclose(logits, ref_forward(x), atol=1e-5, rtol=1e-5), \
        "f32 mismatch vs reference"

    # --- larger batch exercising the multi-block pipelined grid path ---
    Bl = 2048
    xl = jax.random.normal(k_xl, (Bl, D), jnp.float32)
    logits_l = jax.block_until_ready(
        nonlinear_net_forward_prepared(xl, params_f32, block_b=1024))
    assert logits_l.shape == (Bl, O)
    assert jnp.allclose(logits_l, ref_forward(xl), atol=1e-5, rtol=1e-5), \
        "f32 multi-block mismatch vs reference"

    # --- bf16-staged path (v6e/v7x HBM-bound recommendation), f32 accumulation ---
    params_bf16 = prepare_nonlinear_net_params(w1, b1, w2, b2, jnp.bfloat16)
    logits_bf16 = jax.block_until_ready(
        nonlinear_net_forward_prepared(x, params_bf16))
    assert jnp.allclose(logits_bf16, ref_forward(x), atol=5e-2, rtol=5e-2), \
        "bf16 mismatch vs reference"

    # predict()
    preds = jax.block_until_ready(nonlinear_net_predict(x, w1, b1, w2, b2))
    assert preds.shape == (B,)
    assert jnp.array_equal(preds, jnp.argmax(ref_forward(x), axis=1))

    print("KERNEL_OK")
</pallas_src>

<mosaic_0001>
module attributes {stable_mosaic.version = 11 : i64} {
  func.func @_nonlinear_net_kernel(%arg0: i32, %arg1: memref<8x32xf32, #tpu.memory_space<vmem>>, %arg2: memref<32x128xf32, #tpu.memory_space<vmem>>, %arg3: memref<1x128xf32, #tpu.memory_space<vmem>>, %arg4: memref<2x128xf32, #tpu.memory_space<vmem>>, %arg5: memref<2x1xf32, #tpu.memory_space<vmem>>, %arg6: memref<2x8xf32, #tpu.memory_space<vmem>>) attributes {dimension_semantics = [#tpu.dimension_semantics<parallel>], iteration_bounds = array<i64: 1>, scalar_prefetch = 0 : i64, scratch_operands = 0 : i64, tpu.core_type = #tpu.core_type<tc>, window_params = [{transform_indices = @transform_0, window_bounds = array<i64: 8, 32>}, {pipeline_mode = #tpu.pipeline_mode<synchronous>, transform_indices = @transform_1, window_bounds = array<i64: 32, 128>}, {pipeline_mode = #tpu.pipeline_mode<synchronous>, transform_indices = @transform_2, window_bounds = array<i64: 1, 128>}, {pipeline_mode = #tpu.pipeline_mode<synchronous>, transform_indices = @transform_3, window_bounds = array<i64: 2, 128>}, {pipeline_mode = #tpu.pipeline_mode<synchronous>, transform_indices = @transform_4, window_bounds = array<i64: 2, 1>}, {transform_indices = @transform_5, window_bounds = array<i64: 2, 8>}]} {
    %c0 = arith.constant 0 : index
    %c0_0 = arith.constant 0 : index
    %0 = vector.load %arg1[%c0, %c0_0] : memref<8x32xf32, #tpu.memory_space<vmem>>, vector<8x32xf32>
    %c0_1 = arith.constant 0 : index
    %c0_2 = arith.constant 0 : index
    %1 = vector.load %arg2[%c0_1, %c0_2] : memref<32x128xf32, #tpu.memory_space<vmem>>, vector<32x128xf32>
    %cst = arith.constant dense<0.000000e+00> : vector<8x128xf32>
    %2 = tpu.matmul %0, %1, %cst {dimension_numbers = #tpu.dot_dimension_numbers<[1], [0], [0], [1], [0, 0, 1, 1], [], []>} : vector<8x32xf32>, vector<32x128xf32>, vector<8x128xf32> -> vector<8x128xf32>
    %c0_3 = arith.constant 0 : index
    %c0_4 = arith.constant 0 : index
    %3 = vector.load %arg3[%c0_3, %c0_4] : memref<1x128xf32, #tpu.memory_space<vmem>>, vector<1x128xf32>
    %4 = vector.broadcast %3 : vector<1x128xf32> to vector<8x128xf32>
    %5 = arith.addf %2, %4 : vector<8x128xf32>
    %6 = math.tanh %5 : vector<8x128xf32>
    %c0_5 = arith.constant 0 : index
    %c0_6 = arith.constant 0 : index
    %7 = vector.load %arg4[%c0_5, %c0_6] : memref<2x128xf32, #tpu.memory_space<vmem>>, vector<2x128xf32>
    %cst_7 = arith.constant dense<0.000000e+00> : vector<2x8xf32>
    %8 = tpu.matmul %7, %6, %cst_7 {dimension_numbers = #tpu.dot_dimension_numbers<[1], [1], [0], [0], [0, 0, 1, 0], [], []>} : vector<2x128xf32>, vector<8x128xf32>, vector<2x8xf32> -> vector<2x8xf32>
    %c0_8 = arith.constant 0 : index
    %c0_9 = arith.constant 0 : index
    %9 = vector.load %arg5[%c0_8, %c0_9] : memref<2x1xf32, #tpu.memory_space<vmem>>, vector<2x1xf32>
    %10 = vector.broadcast %9 : vector<2x1xf32> to vector<2x8xf32>
    %11 = arith.addf %8, %10 : vector<2x8xf32>
    %c0_10 = arith.constant 0 : index
    %c0_11 = arith.constant 0 : index
    %12 = vector.load %arg6[%c0_10, %c0_11] : memref<2x8xf32, #tpu.memory_space<vmem>>, vector<2x8xf32>
    tpu.vector_store %arg6[%c0_10, %c0_11], %11 {strides = array<i32>} : memref<2x8xf32, #tpu.memory_space<vmem>>, vector<2x8xf32>,
    return
  }
  func.func @transform_0(%arg0: i32) -> (i32, i32) {
    %c0_i32 = arith.constant 0 : i32
    %c0_i32_0 = arith.constant 0 : i32
    return %arg0, %c0_i32 : i32, i32
  }
  func.func @transform_1(%arg0: i32) -> (i32, i32) {
    %c0_i32 = arith.constant 0 : i32
    %c0_i32_0 = arith.constant 0 : i32
    %c0_i32_1 = arith.constant 0 : i32
    return %c0_i32, %c0_i32_0 : i32, i32
  }
  func.func @transform_2(%arg0: i32) -> (i32, i32) {
    %c0_i32 = arith.constant 0 : i32
    %c0_i32_0 = arith.constant 0 : i32
    %c0_i32_1 = arith.constant 0 : i32
    return %c0_i32, %c0_i32_0 : i32, i32
  }
  func.func @transform_3(%arg0: i32) -> (i32, i32) {
    %c0_i32 = arith.constant 0 : i32
    %c0_i32_0 = arith.constant 0 : i32
    %c0_i32_1 = arith.constant 0 : i32
    return %c0_i32, %c0_i32_0 : i32, i32
  }
  func.func @transform_4(%arg0: i32) -> (i32, i32) {
    %c0_i32 = arith.constant 0 : i32
    %c0_i32_0 = arith.constant 0 : i32
    %c0_i32_1 = arith.constant 0 : i32
    return %c0_i32, %c0_i32_0 : i32, i32
  }
  func.func @transform_5(%arg0: i32) -> (i32, i32) {
    %c0_i32 = arith.constant 0 : i32
    %c0_i32_0 = arith.constant 0 : i32
    return %c0_i32, %arg0 : i32, i32
  }
}

</mosaic_0001>

<llo_original>
// kernel: tpu_custom_call.1
$region0: #{tpu_custom_call.1}
  #allocation0 [shape = 'u32[]', space=smem, size = 0x4, offset = 0x4, fixed_abs, tag = 'smem constant byte address 0x4 - core index']
  #allocation1 [shape = 'u32[144,128]{1,0:T(1,128)}', space=vmem, size = 0x12000, scoped, tag = 'internal scratch']
  %s0 = inlined_call_operand.hbm [shape: f32[8,32], index: 0, kind: input, shape index: {}]
  %s1 = inlined_call_operand.hbm [shape: f32[32,128], index: 1, kind: input, shape index: {}]
  %s2 = inlined_call_operand.vmem [shape: f32[1,128], index: 2, kind: input, shape index: {}]
  %s3 = inlined_call_operand.vmem [shape: f32[2,128], index: 3, kind: input, shape index: {}]
  %s4 = inlined_call_operand.vmem [shape: f32[2,1], index: 4, kind: input, shape index: {}]
  %s5 = inlined_call_operand.hbm [shape: f32[2,8], index: 5, kind: output, shape index: {}]
  %s6 = sld [smem:[#allocation0]]
  $region38: #{tpu_custom_call.1} parent=0
    _
  %s8 = ssub.s32 1, %s6
  %s9 = scalar_select 0, %s8, %s6
  $region1: #{tpu_custom_call.1} parent=0
    #allocation2 [shape = 'u8[4096]{0}', space=vmem, size = 0x1000, scoped, tag = 'input window, operand 0, single buffered']
    #allocation3 [shape = 's32[1]{0}', space=sflag, size = 0x4, scoped, tag = 'scoped memory for tpu_custom_call.1']
    #allocation4 [shape = 's32[1]{0}', space=sflag, size = 0x4, scoped, tag = 'scoped memory for tpu_custom_call.1']
    #allocation5 [shape = 'u8[16384]{0}', space=vmem, size = 0x4000, scoped, tag = 'input window, operand 1, single buffered']
    #allocation6 [shape = 's32[1]{0}', space=sflag, size = 0x4, scoped, tag = 'scoped memory for tpu_custom_call.1']
    #allocation7 [shape = 'u8[1024]{0}', space=vmem, size = 0x400, scoped, tag = 'output window, operand 0, single buffered']
    %10 = vsyncpa [#allocation3], 0
    %11 = vsyncpa [#allocation6], 0
    %12 = vsyncpa [#allocation4], 0
    // Predicated region
    $region2: #{tpu_custom_call.1} parent=1 // pred_check
      _
    $region3: #{tpu_custom_call.1} parent=1 // pred_check_branch
      %14 = sbr.rel (0) target = $region5
    $region4: #{tpu_custom_call.1} parent=1 // pred_region
      %s16 = ssub.s32 128, 128
      %17 = vsyncadd [#allocation3], %s16
      %s19 = sshll.u32 [#allocation2], 4
      %s20 = int_to_ptr.vmem [resolvable:$true] %s19
      %22 = dma.hbm_to_vmem [thread:$0]  %s0, 128, %s20, [#allocation3]
    $region5: #{tpu_custom_call.1} parent=1 // pred_fallthru
      _
    // Predicated region
    $region6: #{tpu_custom_call.1} parent=1 // pred_check
      _
    $region7: #{tpu_custom_call.1} parent=1 // pred_check_branch
      %24 = sbr.rel (0) target = $region9
    $region8: #{tpu_custom_call.1} parent=1 // pred_region
      %s26 = ssub.s32 512, 512
      %27 = vsyncadd [#allocation6], %s26
      %s28 = sshll.u32 [#allocation5], 4
      %s29 = int_to_ptr.vmem [resolvable:$true] %s28
      %34 = dma.hbm_to_vmem [thread:$0]  %s1, 512, %s29, [#allocation6], 128, 128, 8
    $region9: #{tpu_custom_call.1} parent=1 // pred_fallthru
      _
    // Predicated region
    $region10: #{tpu_custom_call.1} parent=1 // pred_check
      _
    $region11: #{tpu_custom_call.1} parent=1 // pred_check_branch
      %36 = sbr.rel (0) target = $region13
    $region12: #{tpu_custom_call.1} parent=1 // pred_region
      _
    $region13: #{tpu_custom_call.1} parent=1 // pred_fallthru
      _
    // Predicated region
    $region14: #{tpu_custom_call.1} parent=1 // pred_check
      _
    $region15: #{tpu_custom_call.1} parent=1 // pred_check_branch
      %38 = sbr.rel (0) target = $region17
    $region16: #{tpu_custom_call.1} parent=1 // pred_region
      _
    $region17: #{tpu_custom_call.1} parent=1 // pred_fallthru
      _
    // Predicated region
    $region18: #{tpu_custom_call.1} parent=1 // pred_check
      _
    $region19: #{tpu_custom_call.1} parent=1 // pred_check_branch
      %40 = sbr.rel (0) target = $region21
    $region20: #{tpu_custom_call.1} parent=1 // pred_region
      _
    $region21: #{tpu_custom_call.1} parent=1 // pred_fallthru
      _
    // Predicated region
    $region22: #{tpu_custom_call.1} parent=1 // pred_check
      _
    $region23: #{tpu_custom_call.1} parent=1 // pred_check_branch
      %42 = sbr.rel (0) target = $region25
    $region24: #{tpu_custom_call.1} parent=1 // pred_region
      %43 = dma.done [#allocation3], 128
    $region25: #{tpu_custom_call.1} parent=1 // pred_fallthru
      _
    // Predicated region
    $region26: #{tpu_custom_call.1} parent=1 // pred_check
      _
    $region27: #{tpu_custom_call.1} parent=1 // pred_check_branch
      %45 = sbr.rel (0) target = $region29
    $region28: #{tpu_custom_call.1} parent=1 // pred_region
      %46 = dma.done [#allocation6], 512
    $region29: #{tpu_custom_call.1} parent=1 // pred_fallthru
      _
    %v47 = vld [vmem:[#allocation2] sm:$0xff]
    %v48 = vld [vmem:[#allocation5] sm:$0xff]
    %v49 = vld [vmem:[#allocation5 + $0x8] sm:$0xff]
    %v50 = vld [vmem:[#allocation5 + $0x10] sm:$0xff]
    %v51 = vld [vmem:[#allocation5 + $0x18] sm:$0xff]
    %v52 = vld [vmem:[%s2] sm:$0x1]
    %v54 = vlaneseq
    %v55 = vshrl.u32 %v54, 7
    %v56 = vsub.s32 0, %v55
    %v57 = vrot.slane %v52, %v56
    %vm59 = vcmask 261120
    %v61 = vsel %vm59, %v47, 0
    %63 = vmatprep.subr.mxu0 0.0
    %64 = vmatpush1.msra.mxu0 %v48
    %65 = vmatprep.subr.mxu0 0.0
    %66 = vmatpush1.msra.mxu0 %v49
    %67 = vmatprep.subr.mxu0 0.0
    %68 = vmatpush1.msra.mxu0 %v50
    %69 = vmatprep.subr.mxu0 0.0
    %70 = vmatpush1.msra.mxu0 %v51
    %71 = vmatprep.subr.mxu0 0.0
    %72 = vmatpush1.msra.mxu0 0.0
    %73 = vmatprep.subr.mxu0 0.0
    %74 = vmatpush1.msra.mxu0 0.0
    %75 = vmatprep.subr.mxu0 0.0
    %76 = vmatpush1.msra.mxu0 0.0
    %77 = vmatprep.subr.mxu0 0.0
    %78 = vmatpush1.msra.mxu0 0.0
    %79 = vmatprep.subr.mxu0 0.0
    %80 = vmatpush1.msra.mxu0 0.0
    %81 = vmatprep.subr.mxu0 0.0
    %82 = vmatpush1.msra.mxu0 0.0
    %83 = vmatprep.subr.mxu0 0.0
    %84 = vmatpush1.msra.mxu0 0.0
    %85 = vmatprep.subr.mxu0 0.0
    %86 = vmatpush1.msra.mxu0 0.0
    %87 = vmatprep.subr.mxu0 0.0
    %88 = vmatpush1.msra.mxu0 0.0
    %89 = vmatprep.subr.mxu0 0.0
    %90 = vmatpush1.msra.mxu0 0.0
    %91 = vmatprep.subr.mxu0 0.0
    %92 = vmatpush1.msra.mxu0 0.0
    %93 = vmatprep.subr.mxu0 0.0
    %94 = vmatpush1.msra.mxu0 0.0
    %95 = vmatprep.subr.mxu0 0.0
    %96 = vmatpush1.msra.mxu0 0.0
    %97 = vmatprep.subr.mxu0 0.0
    %98 = vmatpush1.msra.mxu0 0.0
    %99 = vmatprep.subr.mxu0 0.0
    %100 = vmatpush1.msra.mxu0 0.0
    %101 = vmatprep.subr.mxu0 0.0
    %102 = vmatpush1.msra.mxu0 0.0
    %103 = vmatprep.subr.mxu0 0.0
    %104 = vmatpush1.msra.mxu0 0.0
    %105 = vmatprep.subr.mxu0 0.0
    %106 = vmatpush1.msra.mxu0 0.0
    %107 = vmatprep.subr.mxu0 0.0
    %108 = vmatpush1.msra.mxu0 0.0
    %109 = vmatprep.subr.mxu0 0.0
    %110 = vmatpush1.msra.mxu0 0.0
    %111 = vmatprep.subr.mxu0 0.0
    %112 = vmatpush1.msra.mxu0 0.0
    %113 = vmatprep.subr.mxu0 0.0
    %114 = vmatpush1.msra.mxu0 0.0
    %115 = vmatprep.subr.mxu0 0.0
    %116 = vmatpush1.msra.mxu0 0.0
    %117 = vmatprep.subr.mxu0 0.0
    %118 = vmatpush1.msra.mxu0 0.0
    %119 = vmatprep.subr.mxu0 0.0
    %120 = vmatpush1.msra.mxu0 0.0
    %121 = vmatprep.subr.mxu0 0.0
    %122 = vmatpush1.msra.mxu0 0.0
    %123 = vmatprep.subr.mxu0 0.0
    %124 = vmatpush1.msra.mxu0 0.0
    %125 = vmatprep.subr.mxu0 0.0
    %126 = vmatpush1.msra.mxu0 0.0
    %127 = vmatprep.mubr.f32.mxu0 0.0
    %128 = vmatmul.mubr.f32.gmra.mrb[0].mxu0 %v61
    %v129 = vpop.f32.mrb[0].mxu0
    %v130 = vadd.f32 %v57, %v129
    %v131 = vpop.f32.mrb[0].mxu0
    %132 = vdwg.mxu0
    %v133 = vtanh.pop %v130
    %v134 = vld [vmem:[%s3] sm:$0x3]
    %v135 = vld [vmem:[%s4] sm:$0x3]
    %137 = vset.pattern.permute.xlu0 0
    %138 = vperm.xlu0 %137, %v135
    %v139 = vpop.permute.xlu0 %138
    %141 = vmatprep.subr.mxu0 0.0
    %142 = vmatpush1.xpose.msra.mxu0 %v133
    %143 = vmatprep.subr.mxu0 0.0
    %144 = vmatpush1.xpose.msra.mxu0 0.0
    %145 = vmatprep.subr.mxu0 0.0
    %146 = vmatpush1.xpose.msra.mxu0 0.0
    %147 = vmatprep.subr.mxu0 0.0
    %148 = vmatpush1.xpose.msra.mxu0 0.0
    %149 = vmatprep.subr.mxu0 0.0
    %150 = vmatpush1.xpose.msra.mxu0 0.0
    %151 = vmatprep.subr.mxu0 0.0
    %152 = vmatpush1.xpose.msra.mxu0 0.0
    %153 = vmatprep.subr.mxu0 0.0
    %154 = vmatpush1.xpose.msra.mxu0 0.0
    %155 = vmatprep.subr.mxu0 0.0
    %156 = vmatpush1.xpose.msra.mxu0 0.0
    %157 = vmatprep.subr.mxu0 0.0
    %158 = vmatpush1.xpose.msra.mxu0 0.0
    %159 = vmatprep.subr.mxu0 0.0
    %160 = vmatpush1.xpose.msra.mxu0 0.0
    %161 = vmatprep.subr.mxu0 0.0
    %162 = vmatpush1.xpose.msra.mxu0 0.0
    %163 = vmatprep.subr.mxu0 0.0
    %164 = vmatpush1.xpose.msra.mxu0 0.0
    %165 = vmatprep.subr.mxu0 0.0
    %166 = vmatpush1.xpose.msra.mxu0 0.0
    %167 = vmatprep.subr.mxu0 0.0
    %168 = vmatpush1.xpose.msra.mxu0 0.0
    %169 = vmatprep.subr.mxu0 0.0
    %170 = vmatpush1.xpose.msra.mxu0 0.0
    %171 = vmatprep.subr.mxu0 0.0
    %172 = vmatpush1.xpose.msra.mxu0 0.0
    %173 = vmatprep.subr.mxu0 0.0
    %174 = vmatpush1.xpose.msra.mxu0 0.0
    %175 = vmatprep.subr.mxu0 0.0
    %176 = vmatpush1.xpose.msra.mxu0 0.0
    %177 = vmatprep.subr.mxu0 0.0
    %178 = vmatpush1.xpose.msra.mxu0 0.0
    %179 = vmatprep.subr.mxu0 0.0
    %180 = vmatpush1.xpose.msra.mxu0 0.0
    %181 = vmatprep.subr.mxu0 0.0
    %182 = vmatpush1.xpose.msra.mxu0 0.0
    %183 = vmatprep.subr.mxu0 0.0
    %184 = vmatpush1.xpose.msra.mxu0 0.0
    %185 = vmatprep.subr.mxu0 0.0
    %186 = vmatpush1.xpose.msra.mxu0 0.0
    %187 = vmatprep.subr.mxu0 0.0
    %188 = vmatpush1.xpose.msra.mxu0 0.0
    %189 = vmatprep.subr.mxu0 0.0
    %190 = vmatpush1.xpose.msra.mxu0 0.0
    %191 = vmatprep.subr.mxu0 0.0
    %192 = vmatpush1.xpose.msra.mxu0 0.0
    %193 = vmatprep.subr.mxu0 0.0
    %194 = vmatpush1.xpose.msra.mxu0 0.0
    %195 = vmatprep.subr.mxu0 0.0
    %196 = vmatpush1.xpose.msra.mxu0 0.0
    %197 = vmatprep.subr.mxu0 0.0
    %198 = vmatpush1.xpose.msra.mxu0 0.0
    %199 = vmatprep.subr.mxu0 0.0
    %200 = vmatpush1.xpose.msra.mxu0 0.0
    %201 = vmatprep.subr.mxu0 0.0
    %202 = vmatpush1.xpose.msra.mxu0 0.0
    %203 = vmatprep.subr.mxu0 0.0
    %204 = vmatpush1.xpose.msra.mxu0 0.0
    %205 = vmatprep.mubr.f32.mxu0 0.0
    %206 = vmatmul.mubr.f32.gmra.mrb[0].mxu0 %v134
    %v207 = vpop.f32.mrb[0].mxu0
    %v208 = vadd.f32 %v139, %v207
    %v209 = vpop.f32.mrb[0].mxu0
    %210 = vdwg.mxu0
    %vm211 = vcmask 58368
    %212 = vst.msk [vmem:[#allocation7] sm:$0x3] %vm211, %v208
    // Predicated region
    $region30: #{tpu_custom_call.1} parent=1 // pred_check
      _
    $region31: #{tpu_custom_call.1} parent=1 // pred_check_branch
      %214 = sbr.rel (0) target = $region33
    $region32: #{tpu_custom_call.1} parent=1 // pred_region
      %s216 = ssub.s32 32, 32
      %217 = vsyncadd [#allocation4], %s216
      %s219 = sshll.u32 [#allocation7], 4
      %s220 = int_to_ptr.vmem [resolvable:$true] %s219
      %222 = dma.vmem_to_hbm [thread:$0]  %s220, 32, %s5, [#allocation4]
    $region33: #{tpu_custom_call.1} parent=1 // pred_fallthru
      _
    // Predicated region
    $region34: #{tpu_custom_call.1} parent=1 // pred_check
      _
    $region35: #{tpu_custom_call.1} parent=1 // pred_check_branch
      %224 = sbr.rel (0) target = $region37
    $region36: #{tpu_custom_call.1} parent=1 // pred_region
      %225 = dma.done [#allocation4], 32
    $region37: #{tpu_custom_call.1} parent=1 // pred_fallthru
      _
    %226 = vsyncpa [#allocation3], 1
    %227 = vsyncpa [#allocation6], 1
    %228 = vsyncpa [#allocation4], 1

</llo_original>
